<compile_context>
chip_gen: v7x
topology: tpu7x:2x2x1
jax: 0.10.0
libtpu: 0.0.40
codegen_flags: <defaults>
</compile_context>

<pallas_src>
import functools

import jax
import jax.numpy as jnp
from jax import lax
from jax.experimental import pallas as pl
from jax.experimental.pallas import tpu as pltpu

EPS = 1e-5  # default eps for both nn.LayerNorm and nn.InstanceNorm1d


def dualnorm_kernel(x_ref, wb_ref, bb_ref, wa_ref, ba_ref, o_ref, *, size):
    bt, seq, H = x_ref.shape
    M = bt * seq
    mdt = wb_ref.dtype                               # matmul operand dtype (bf16 default)

    # ---- dense_before on the folded (Bt*S, H) block ------------------------
    # (seq is asserted to be a multiple of 8 in the wrapper, so the reshapes
    #  below are layout-free views, not relayout copies.)
    x2 = x_ref[...].reshape(M, H)
    h2 = jnp.dot(x2.astype(mdt), wb_ref[...],
                 preferred_element_type=jnp.float32) + bb_ref[...]     # f32
    h = h2.reshape(bt, seq, H)
    hsq = h * h                                      # shared by both norms
    hsq2 = hsq.reshape(M, H)

    # ---- InstanceNorm1d stats: reduce over the sequence axis (axis=1) ------
    # Computed full lane width (left/right halves share the same 128-lane
    # vregs, so masking would not save vector work); only the left half of
    # these stats is ultimately selected.
    inv_s = 1.0 / seq
    mu_in = jnp.sum(h, axis=1, keepdims=True) * inv_s                  # (Bt,1,H)
    var_in = jnp.maximum(
        jnp.sum(hsq, axis=1, keepdims=True) * inv_s - mu_in * mu_in, 0.0)

    # ---- LayerNorm stats: right half of the lane axis, via the MXU ---------
    # Skinny f32 dots with a masked-ones column replace two full-tile masked
    # selects + two XLU lane reductions (v6e/v7x only have 2 XLUs; the MXU
    # has plenty of slack once the main matmuls are bf16).
    msel = ((lax.broadcasted_iota(jnp.int32, (H, 1), 0) >= size)
            .astype(jnp.float32)) * (1.0 / size)                       # (H,1)
    mu_ln = jnp.dot(h2, msel,
                    preferred_element_type=jnp.float32).reshape(bt, seq, 1)
    ex2_ln = jnp.dot(hsq2, msel,
                     preferred_element_type=jnp.float32).reshape(bt, seq, 1)
    var_ln = jnp.maximum(ex2_ln - mu_ln * mu_ln, 0.0)

    # ---- fused half-select + normalization ---------------------------------
    right_mask = lax.broadcasted_iota(jnp.int32, (1, 1, H), 2) >= size
    mu = jnp.where(right_mask, mu_ln, mu_in)                           # (Bt,S,H)
    r = jnp.where(right_mask,
                  lax.rsqrt(var_ln + EPS),
                  lax.rsqrt(var_in + EPS))                             # (Bt,S,H)
    y = (h - mu) * r

    # ---- dense_after --------------------------------------------------------
    y2 = y.reshape(M, H).astype(mdt)
    out = jnp.dot(y2, wa_ref[...],
                  preferred_element_type=jnp.float32) + ba_ref[...]
    o_ref[...] = out.reshape(bt, seq, H).astype(o_ref.dtype)


def _pick_batch_tile(B, S, H, *, in_bytes=4, out_bytes=4,
                     target_rows=512, vmem_budget_bytes=30 << 20, min_grid=2):
    """Batch elements per grid step.

    Aims for ~target_rows matmul rows per step (mem-bound tiles reach ~85% of
    HBM roofline at 512-1024 rows vs ~63% at 256), keeps the real per-step
    VMEM footprint (double-buffered in/out blocks + ~3 live f32 full-width
    temporaries + 1 bf16 temporary) under vmem_budget_bytes (v7x has only
    64 MiB VMEM per TC), leaves at least `min_grid` grid steps when possible
    so both v7x TensorCores get work, and never silently collapses to bt=1
    for awkward batch sizes (snaps to a nearby divisor, otherwise lets the
    caller use a ragged last block via cdiv).
    """
    per_b = S * H * (2 * in_bytes + 2 * out_bytes + 3 * 4 + 2)
    bt_cap = max(1, vmem_budget_bytes // per_b)
    bt = max(1, min(B, max(1, target_rows // S), bt_cap))
    if B >= min_grid:
        bt = min(bt, max(1, B // min_grid))          # keep >= min_grid grid steps
    # Snap to an exact divisor of B if one is reasonably close (>= bt/2);
    # otherwise keep bt and let grid = cdiv(B, bt) handle the ragged tail.
    for d in range(bt, 0, -1):
        if B % d == 0:
            if 2 * d >= bt:
                bt = d
            break
    return bt


def dualnorm(x, w_before, b_before, w_after, b_after, *, size,
             matmul_dtype=jnp.bfloat16):
    """x: (B, S, 2*size).  w_*: (2*size, 2*size) stored (in, out), i.e. the
    transpose of the PyTorch Linear weight.

    matmul_dtype controls the MXU operand dtype (f32 accumulation either way);
    bf16 is the native MXU path on all TPU generations.  Pass bf16 `x` (the
    output dtype follows `x.dtype`) to also halve HBM traffic on mem-bound
    generations (v5e).
    """
    B, S, H = x.shape
    assert H == 2 * size
    # Sublane alignment so the (Bt,S,H)<->(Bt*S,H) reshapes are free views.
    assert S % 8 == 0, "sequence length must be a multiple of 8 (pad S)"
    # TODO(synk): support ragged / unpadded S via batched 3D dots instead of
    # the folded (Bt*S, H) reshape.

    mdt = matmul_dtype if matmul_dtype is not None else x.dtype
    wb = w_before.astype(mdt)
    wa = w_after.astype(mdt)
    bb = b_before.reshape(1, H).astype(jnp.float32)
    ba = b_after.reshape(1, H).astype(jnp.float32)

    itemsize = x.dtype.itemsize
    bt = _pick_batch_tile(B, S, H, in_bytes=itemsize, out_bytes=itemsize)
    grid = (pl.cdiv(B, bt),)

    kernel = functools.partial(dualnorm_kernel, size=size)
    return pl.pallas_call(
        kernel,
        out_shape=jax.ShapeDtypeStruct((B, S, H), x.dtype),
        grid_spec=pltpu.PrefetchScalarGridSpec(
            num_scalar_prefetch=0,
            grid=grid,
            in_specs=[
                pl.BlockSpec((bt, S, H), lambda b: (b, 0, 0)),
                pl.BlockSpec((H, H), lambda b: (0, 0)),
                pl.BlockSpec((1, H), lambda b: (0, 0)),
                pl.BlockSpec((H, H), lambda b: (0, 0)),
                pl.BlockSpec((1, H), lambda b: (0, 0)),
            ],
            out_specs=pl.BlockSpec((bt, S, H), lambda b: (b, 0, 0)),
        ),
        compiler_params=pltpu.CompilerParams(
            dimension_semantics=("parallel",),
            # Above v5e's 16 MiB scoped default, below v7x's 64 MiB physical;
            # the tile picker budgets the per-step footprint at <= 30 MiB.
            vmem_limit_bytes=48 << 20,
        ),
    )(x, wb, bb, wa, ba)


def dualnorm_ref(x, w_before, b_before, w_after, b_after, *, size):
    """Pure-JAX reference matching the PyTorch module (f32, two-pass stats)."""
    h = jnp.einsum("bsh,hk->bsk", x, w_before,
                   precision=lax.Precision.HIGHEST) + b_before
    left, right = h[..., :size], h[..., size:]
    mu_i = jnp.mean(left, axis=1, keepdims=True)
    var_i = jnp.mean((left - mu_i) ** 2, axis=1, keepdims=True)
    left = (left - mu_i) * lax.rsqrt(var_i + EPS)
    mu_l = jnp.mean(right, axis=-1, keepdims=True)
    var_l = jnp.mean((right - mu_l) ** 2, axis=-1, keepdims=True)
    right = (right - mu_l) * lax.rsqrt(var_l + EPS)
    y = jnp.concatenate([left, right], axis=-1)
    return jnp.einsum("bsh,hk->bsk", y, w_after,
                      precision=lax.Precision.HIGHEST) + b_after


if __name__ == "__main__":
    size = 64               # DualNorm(size); features = 2*size = 128 (lane-aligned)
    B, S, H = 4, 8, 2 * size  # B=4 -> bt=2 -> grid=(2,): exercises pipelining/megacore

    key = jax.random.PRNGKey(0)
    kx, kw1, kb1, kw2, kb2 = jax.random.split(key, 5)

    x = jax.random.normal(kx, (B, S, H), dtype=jnp.float32)

    # nn.Linear(2*size, 2*size) params, stored (in, out) so the kernel does
    # x @ W directly (== x @ W_torch^T).
    bound = 1.0 / (H ** 0.5)
    w_before = jax.random.uniform(kw1, (H, H), jnp.float32, -bound, bound)
    b_before = jax.random.uniform(kb1, (H,), jnp.float32, -bound, bound)
    w_after = jax.random.uniform(kw2, (H, H), jnp.float32, -bound, bound)
    b_after = jax.random.uniform(kb2, (H,), jnp.float32, -bound, bound)

    ref = dualnorm_ref(x, w_before, b_before, w_after, b_after, size=size)

    # Default fast path: bf16 MXU operands, f32 accumulation.
    out = dualnorm(x, w_before, b_before, w_after, b_after, size=size)
    out = jax.block_until_ready(out)
    assert out.shape == (B, S, H)
    err_bf16 = float(jnp.max(jnp.abs(out - ref)))
    assert err_bf16 < 5e-2, f"bf16 path mismatch, max abs err = {err_bf16}"

    # f32 operand path matches the f32 reference tightly.
    out32 = dualnorm(x, w_before, b_before, w_after, b_after, size=size,
                     matmul_dtype=jnp.float32)
    out32 = jax.block_until_ready(out32)
    err_f32 = float(jnp.max(jnp.abs(out32 - ref)))
    assert err_f32 < 2e-3, f"f32 path mismatch, max abs err = {err_f32}"

    print("KERNEL_OK")
</pallas_src>

<mosaic_0001>
module attributes {stable_mosaic.version = 11 : i64} {
  func.func @dualnorm_kernel(%arg0: i32, %arg1: memref<2x8x128xf32, #tpu.memory_space<vmem>>, %arg2: memref<128x128xbf16, #tpu.memory_space<vmem>>, %arg3: memref<1x128xf32, #tpu.memory_space<vmem>>, %arg4: memref<128x128xbf16, #tpu.memory_space<vmem>>, %arg5: memref<1x128xf32, #tpu.memory_space<vmem>>, %arg6: memref<2x8x128xf32, #tpu.memory_space<vmem>>) attributes {dimension_semantics = [#tpu.dimension_semantics<parallel>], iteration_bounds = array<i64: 2>, scalar_prefetch = 0 : i64, scratch_operands = 0 : i64, tpu.core_type = #tpu.core_type<tc>, window_params = [{transform_indices = @transform_0, window_bounds = array<i64: 2, 8, 128>}, {pipeline_mode = #tpu.pipeline_mode<synchronous>, transform_indices = @transform_1, window_bounds = array<i64: 128, 128>}, {pipeline_mode = #tpu.pipeline_mode<synchronous>, transform_indices = @transform_2, window_bounds = array<i64: 1, 128>}, {pipeline_mode = #tpu.pipeline_mode<synchronous>, transform_indices = @transform_3, window_bounds = array<i64: 128, 128>}, {pipeline_mode = #tpu.pipeline_mode<synchronous>, transform_indices = @transform_4, window_bounds = array<i64: 1, 128>}, {transform_indices = @transform_5, window_bounds = array<i64: 2, 8, 128>}]} {
    %c0 = arith.constant 0 : index
    %c0_0 = arith.constant 0 : index
    %c0_1 = arith.constant 0 : index
    %0 = vector.load %arg1[%c0, %c0_0, %c0_1] : memref<2x8x128xf32, #tpu.memory_space<vmem>>, vector<2x8x128xf32>
    %1 = vector.shape_cast %0 : vector<2x8x128xf32> to vector<16x128xf32>
    %2 = arith.truncf %1 : vector<16x128xf32> to vector<16x128xbf16>
    %c0_2 = arith.constant 0 : index
    %c0_3 = arith.constant 0 : index
    %3 = vector.load %arg2[%c0_2, %c0_3] : memref<128x128xbf16, #tpu.memory_space<vmem>>, vector<128x128xbf16>
    %cst = arith.constant dense<0.000000e+00> : vector<16x128xf32>
    %4 = tpu.matmul %2, %3, %cst {dimension_numbers = #tpu.dot_dimension_numbers<[1], [0], [0], [1], [0, 0, 1, 1], [], []>} : vector<16x128xbf16>, vector<128x128xbf16>, vector<16x128xf32> -> vector<16x128xf32>
    %c0_4 = arith.constant 0 : index
    %c0_5 = arith.constant 0 : index
    %5 = vector.load %arg3[%c0_4, %c0_5] : memref<1x128xf32, #tpu.memory_space<vmem>>, vector<1x128xf32>
    %6 = vector.broadcast %5 : vector<1x128xf32> to vector<16x128xf32>
    %7 = arith.addf %4, %6 : vector<16x128xf32>
    %8 = vector.shape_cast %7 : vector<16x128xf32> to vector<2x8x128xf32>
    %9 = arith.mulf %8, %8 : vector<2x8x128xf32>
    %10 = vector.shape_cast %9 : vector<2x8x128xf32> to vector<16x128xf32>
    %cst_6 = arith.constant dense<0.000000e+00> : vector<2x128xf32>
    %11 = vector.multi_reduction <add>, %8, %cst_6 [1] : vector<2x8x128xf32> to vector<2x128xf32>
    %12 = vector.shape_cast %11 : vector<2x128xf32> to vector<2x1x128xf32>
    %cst_7 = arith.constant 1.250000e-01 : f32
    %13 = vector.broadcast %cst_7 : f32 to vector<2x1x128xf32>
    %14 = arith.mulf %12, %13 : vector<2x1x128xf32>
    %cst_8 = arith.constant dense<0.000000e+00> : vector<2x128xf32>
    %15 = vector.multi_reduction <add>, %9, %cst_8 [1] : vector<2x8x128xf32> to vector<2x128xf32>
    %16 = vector.shape_cast %15 : vector<2x128xf32> to vector<2x1x128xf32>
    %cst_9 = arith.constant 1.250000e-01 : f32
    %17 = vector.broadcast %cst_9 : f32 to vector<2x1x128xf32>
    %18 = arith.mulf %16, %17 : vector<2x1x128xf32>
    %19 = arith.mulf %14, %14 : vector<2x1x128xf32>
    %20 = arith.subf %18, %19 : vector<2x1x128xf32>
    %cst_10 = arith.constant 0.000000e+00 : f32
    %21 = vector.broadcast %cst_10 : f32 to vector<2x1x128xf32>
    %22 = arith.maximumf %20, %21 : vector<2x1x128xf32>
    %23 = tpu.iota {dimensions = array<i32: 0>} : vector<128x1xi32>
    %c64_i32 = arith.constant 64 : i32
    %24 = vector.broadcast %c64_i32 : i32 to vector<128x1xi32>
    %25 = arith.cmpi sge, %23, %24 : vector<128x1xi32>
    %26 = arith.extui %25 : vector<128x1xi1> to vector<128x1xi32>
    %27 = arith.sitofp %26 : vector<128x1xi32> to vector<128x1xf32>
    %cst_11 = arith.constant 1.562500e-02 : f32
    %28 = vector.broadcast %cst_11 : f32 to vector<128x1xf32>
    %29 = arith.mulf %27, %28 : vector<128x1xf32>
    %cst_12 = arith.constant dense<0.000000e+00> : vector<16x1xf32>
    %30 = tpu.matmul %7, %29, %cst_12 {dimension_numbers = #tpu.dot_dimension_numbers<[1], [0], [0], [1], [0, 0, 1, 1], [], []>} : vector<16x128xf32>, vector<128x1xf32>, vector<16x1xf32> -> vector<16x1xf32>
    %31 = vector.shape_cast %30 : vector<16x1xf32> to vector<2x8x1xf32>
    %cst_13 = arith.constant dense<0.000000e+00> : vector<16x1xf32>
    %32 = tpu.matmul %10, %29, %cst_13 {dimension_numbers = #tpu.dot_dimension_numbers<[1], [0], [0], [1], [0, 0, 1, 1], [], []>} : vector<16x128xf32>, vector<128x1xf32>, vector<16x1xf32> -> vector<16x1xf32>
    %33 = vector.shape_cast %32 : vector<16x1xf32> to vector<2x8x1xf32>
    %34 = arith.mulf %31, %31 : vector<2x8x1xf32>
    %35 = arith.subf %33, %34 : vector<2x8x1xf32>
    %cst_14 = arith.constant 0.000000e+00 : f32
    %36 = vector.broadcast %cst_14 : f32 to vector<2x8x1xf32>
    %37 = arith.maximumf %35, %36 : vector<2x8x1xf32>
    %38 = tpu.iota {dimensions = array<i32: 2>} : vector<1x1x128xi32>
    %c64_i32_15 = arith.constant 64 : i32
    %39 = vector.broadcast %c64_i32_15 : i32 to vector<1x1x128xi32>
    %40 = arith.cmpi sge, %38, %39 : vector<1x1x128xi32>
    %41 = vector.shape_cast %40 : vector<1x1x128xi1> to vector<1x1x128xi1>
    %42 = vector.broadcast %41 : vector<1x1x128xi1> to vector<2x8x128xi1>
    %43 = vector.shape_cast %31 : vector<2x8x1xf32> to vector<2x8x1xf32>
    %44 = vector.broadcast %43 : vector<2x8x1xf32> to vector<2x8x128xf32>
    %45 = vector.shape_cast %14 : vector<2x1x128xf32> to vector<2x1x128xf32>
    %46 = vector.broadcast %45 : vector<2x1x128xf32> to vector<2x8x128xf32>
    %47 = arith.select %42, %44, %46 : vector<2x8x128xi1>, vector<2x8x128xf32>
    %cst_16 = arith.constant 9.99999974E-6 : f32
    %48 = vector.broadcast %cst_16 : f32 to vector<2x8x1xf32>
    %49 = arith.addf %37, %48 : vector<2x8x1xf32>
    %50 = math.rsqrt %49 : vector<2x8x1xf32>
    %cst_17 = arith.constant 9.99999974E-6 : f32
    %51 = vector.broadcast %cst_17 : f32 to vector<2x1x128xf32>
    %52 = arith.addf %22, %51 : vector<2x1x128xf32>
    %53 = math.rsqrt %52 : vector<2x1x128xf32>
    %54 = vector.shape_cast %40 : vector<1x1x128xi1> to vector<1x1x128xi1>
    %55 = vector.broadcast %54 : vector<1x1x128xi1> to vector<2x8x128xi1>
    %56 = vector.shape_cast %50 : vector<2x8x1xf32> to vector<2x8x1xf32>
    %57 = vector.broadcast %56 : vector<2x8x1xf32> to vector<2x8x128xf32>
    %58 = vector.shape_cast %53 : vector<2x1x128xf32> to vector<2x1x128xf32>
    %59 = vector.broadcast %58 : vector<2x1x128xf32> to vector<2x8x128xf32>
    %60 = arith.select %55, %57, %59 : vector<2x8x128xi1>, vector<2x8x128xf32>
    %61 = arith.subf %8, %47 : vector<2x8x128xf32>
    %62 = arith.mulf %61, %60 : vector<2x8x128xf32>
    %63 = vector.shape_cast %62 : vector<2x8x128xf32> to vector<16x128xf32>
    %64 = arith.truncf %63 : vector<16x128xf32> to vector<16x128xbf16>
    %c0_18 = arith.constant 0 : index
    %c0_19 = arith.constant 0 : index
    %65 = vector.load %arg4[%c0_18, %c0_19] : memref<128x128xbf16, #tpu.memory_space<vmem>>, vector<128x128xbf16>
    %cst_20 = arith.constant dense<0.000000e+00> : vector<16x128xf32>
    %66 = tpu.matmul %64, %65, %cst_20 {dimension_numbers = #tpu.dot_dimension_numbers<[1], [0], [0], [1], [0, 0, 1, 1], [], []>} : vector<16x128xbf16>, vector<128x128xbf16>, vector<16x128xf32> -> vector<16x128xf32>
    %c0_21 = arith.constant 0 : index
    %c0_22 = arith.constant 0 : index
    %67 = vector.load %arg5[%c0_21, %c0_22] : memref<1x128xf32, #tpu.memory_space<vmem>>, vector<1x128xf32>
    %68 = vector.broadcast %67 : vector<1x128xf32> to vector<16x128xf32>
    %69 = arith.addf %66, %68 : vector<16x128xf32>
    %70 = vector.shape_cast %69 : vector<16x128xf32> to vector<2x8x128xf32>
    %c0_23 = arith.constant 0 : index
    %c0_24 = arith.constant 0 : index
    %c0_25 = arith.constant 0 : index
    %71 = vector.load %arg6[%c0_23, %c0_24, %c0_25] : memref<2x8x128xf32, #tpu.memory_space<vmem>>, vector<2x8x128xf32>
    tpu.vector_store %arg6[%c0_23, %c0_24, %c0_25], %70 {strides = array<i32>} : memref<2x8x128xf32, #tpu.memory_space<vmem>>, vector<2x8x128xf32>,
    return
  }
  func.func @transform_0(%arg0: i32) -> (i32, i32, i32) {
    %c0_i32 = arith.constant 0 : i32
    %c0_i32_0 = arith.constant 0 : i32
    %c0_i32_1 = arith.constant 0 : i32
    return %arg0, %c0_i32, %c0_i32_0 : i32, i32, i32
  }
  func.func @transform_1(%arg0: i32) -> (i32, i32) {
    %c0_i32 = arith.constant 0 : i32
    %c0_i32_0 = arith.constant 0 : i32
    %c0_i32_1 = arith.constant 0 : i32
    return %c0_i32, %c0_i32_0 : i32, i32
  }
  func.func @transform_2(%arg0: i32) -> (i32, i32) {
    %c0_i32 = arith.constant 0 : i32
    %c0_i32_0 = arith.constant 0 : i32
    %c0_i32_1 = arith.constant 0 : i32
    return %c0_i32, %c0_i32_0 : i32, i32
  }
  func.func @transform_3(%arg0: i32) -> (i32, i32) {
    %c0_i32 = arith.constant 0 : i32
    %c0_i32_0 = arith.constant 0 : i32
    %c0_i32_1 = arith.constant 0 : i32
    return %c0_i32, %c0_i32_0 : i32, i32
  }
  func.func @transform_4(%arg0: i32) -> (i32, i32) {
    %c0_i32 = arith.constant 0 : i32
    %c0_i32_0 = arith.constant 0 : i32
    %c0_i32_1 = arith.constant 0 : i32
    return %c0_i32, %c0_i32_0 : i32, i32
  }
  func.func @transform_5(%arg0: i32) -> (i32, i32, i32) {
    %c0_i32 = arith.constant 0 : i32
    %c0_i32_0 = arith.constant 0 : i32
    %c0_i32_1 = arith.constant 0 : i32
    return %arg0, %c0_i32, %c0_i32_0 : i32, i32, i32
  }
}

</mosaic_0001>

<llo_original>
// kernel: tpu_custom_call.1
$region0: #{tpu_custom_call.1}
  #allocation0 [shape = 'u32[]', space=smem, size = 0x4, offset = 0x4, fixed_abs, tag = 'smem constant byte address 0x4 - core index']
  #allocation1 [shape = 'u32[144,128]{1,0:T(1,128)}', space=vmem, size = 0x12000, scoped, tag = 'internal scratch']
  %s0 = inlined_call_operand.hbm [shape: f32[4,8,128], index: 0, kind: input, shape index: {}]
  %s1 = inlined_call_operand.hbm [shape: bf16[128,128], index: 1, kind: input, shape index: {}]
  %s2 = inlined_call_operand.vmem [shape: f32[1,128], index: 2, kind: input, shape index: {}]
  %s3 = inlined_call_operand.hbm [shape: bf16[128,128], index: 3, kind: input, shape index: {}]
  %s4 = inlined_call_operand.vmem [shape: f32[1,128], index: 4, kind: input, shape index: {}]
  %s5 = inlined_call_operand.hbm [shape: f32[4,8,128], index: 5, kind: output, shape index: {}]
  %s6 = sld [smem:[#allocation0]]
  $region65: #{tpu_custom_call.1} parent=0
    _
  %s8 = ssub.s32 1, %s6
  %s9 = scalar_select 0, %s8, %s6
  $region1: #{tpu_custom_call.1} parent=0
    #allocation2 [shape = 'u8[16384]{0}', space=vmem, size = 0x4000, scoped, tag = 'input window, operand 0']
    #allocation3 [shape = 's32[2]{0}', space=sflag, size = 0x8, scoped, tag = 'scoped memory for tpu_custom_call.1']
    #allocation4 [shape = 's32[2]{0}', space=sflag, size = 0x8, scoped, tag = 'scoped memory for tpu_custom_call.1']
    #allocation5 [shape = 'u8[32768]{0}', space=vmem, size = 0x8000, scoped, tag = 'input window, operand 1, single buffered']
    #allocation6 [shape = 's32[1]{0}', space=sflag, size = 0x4, scoped, tag = 'scoped memory for tpu_custom_call.1']
    #allocation7 [shape = 'u8[32768]{0}', space=vmem, size = 0x8000, scoped, tag = 'input window, operand 3, single buffered']
    #allocation8 [shape = 'u8[16384]{0}', space=vmem, size = 0x4000, scoped, tag = 'output window, operand 0']
    %10 = vsyncpa [#allocation3], 0
    %s11 = scalar_lea.sflag [#allocation3], 1
    %12 = vsyncpa %s11, 0
    %13 = vsyncpa [#allocation6], 0
    %14 = vsyncpa [#allocation4], 0
    %s15 = scalar_lea.sflag [#allocation4], 1
    %16 = vsyncpa %s15, 0
    loop: start=0, step=1, limit=4
    $region2: #{tpu_custom_call.1} parent=1 // loop_pre_header
      _
    $region3: #{tpu_custom_call.1} parent=1 // loop_header
      %s18 = sphi 0, %s22
      %p19 = scmp.ge.s32.totalorder %s18, 4
      %s28 = sphi 0, %s30
      %s31 = sphi 0, %s28
      %s32 = sphi 0, %s31
      %s48 = sphi 0, %s32
      %s52 = sphi 0, %s52
      %s54 = sphi 0, %s52
      %s55 = sphi 0, %s54
      %s69 = sphi 0, %s55
      %s73 = sphi 0, %s73
      %s75 = sphi 0, %s73
      %s76 = sphi 0, %s75
      %s90 = sphi 0, %s76
      %s94 = sphi 0, %s94
      %s96 = sphi 0, %s94
      %s97 = sphi 0, %s96
      %s111 = sphi 0, %s97
      %s115 = sphi 0, %s115
      %s117 = sphi 0, %s115
      %s118 = sphi 0, %s117
      %s132 = sphi 0, %s118
      %s138 = sphi 0, %s140
      %s141 = sphi 0, %s138
      %s142 = sphi 0, %s141
      %s158 = sphi 0, %s142
    $region4: #{tpu_custom_call.1} parent=1 // loop_header_branch
      %21 = sbr.rel (%p19) target = $region8
    $region5: #{tpu_custom_call.1} parent=1 // loop_body
      %s23 = ssub.s32 %s18, 1
      %s24 = ssub.s32 %s18, 2
      %s25 = sadd.s32 %s18, 1
      %s26 = ssub.s32 %s18, %s25
      %p27 = scmp.eq.s32.totalorder %s26, 0
      %s29 = sadd.s32 %s28, 1
      %s30 = scalar_select %p27, %s28, %s29
      %p33 = pneg %p27
      %p34 = scmp.eq.s32.totalorder %s18, 1
      %p35 = por %p33, %p34
      %p36 = scmp.ne.s32.totalorder %s28, %s31
      %p37 = scmp.eq.s32.totalorder %s18, 0
      %p38 = por %p36, %p37
      %p39 = scmp.ne.s32.totalorder %s28, %s31
      %p40 = scmp.eq.s32.totalorder %s23, 1
      %p41 = por %p39, %p40
      %p42 = scmp.ne.s32.totalorder %s31, %s32
      %p43 = scmp.eq.s32.totalorder %s23, 0
      %p44 = por %p42, %p43
      %p45 = scmp.ne.s32.totalorder %s31, %s32
      %p46 = scmp.eq.s32.totalorder %s24, 1
      %p47 = por %p45, %p46
      %p49 = scmp.ne.s32.totalorder %s32, %s48
      %p50 = scmp.eq.s32.totalorder %s24, 0
      %p51 = por %p49, %p50
      %s53 = sadd.s32 %s52, 1
      %p56 = scmp.eq.s32.totalorder %s18, 1
      %p57 = scmp.ne.s32.totalorder %s52, %s54
      %p58 = scmp.eq.s32.totalorder %s18, 0
      %p59 = por %p57, %p58
      %p60 = scmp.ne.s32.totalorder %s52, %s54
      %p61 = scmp.eq.s32.totalorder %s23, 1
      %p62 = por %p60, %p61
      %p63 = scmp.ne.s32.totalorder %s54, %s55
      %p64 = scmp.eq.s32.totalorder %s23, 0
      %p65 = por %p63, %p64
      %p66 = scmp.ne.s32.totalorder %s54, %s55
      %p67 = scmp.eq.s32.totalorder %s24, 1
      %p68 = por %p66, %p67
      %p70 = scmp.ne.s32.totalorder %s55, %s69
      %p71 = scmp.eq.s32.totalorder %s24, 0
      %p72 = por %p70, %p71
      %s74 = sadd.s32 %s73, 1
      %p77 = scmp.eq.s32.totalorder %s18, 1
      %p78 = scmp.ne.s32.totalorder %s73, %s75
      %p79 = scmp.eq.s32.totalorder %s18, 0
      %p80 = por %p78, %p79
      %p81 = scmp.ne.s32.totalorder %s73, %s75
      %p82 = scmp.eq.s32.totalorder %s23, 1
      %p83 = por %p81, %p82
      %p84 = scmp.ne.s32.totalorder %s75, %s76
      %p85 = scmp.eq.s32.totalorder %s23, 0
      %p86 = por %p84, %p85
      %p87 = scmp.ne.s32.totalorder %s75, %s76
      %p88 = scmp.eq.s32.totalorder %s24, 1
      %p89 = por %p87, %p88
      %p91 = scmp.ne.s32.totalorder %s76, %s90
      %p92 = scmp.eq.s32.totalorder %s24, 0
      %p93 = por %p91, %p92
      %s95 = sadd.s32 %s94, 1
      %p98 = scmp.eq.s32.totalorder %s18, 1
      %p99 = scmp.ne.s32.totalorder %s94, %s96
      %p100 = scmp.eq.s32.totalorder %s18, 0
      %p101 = por %p99, %p100
      %p102 = scmp.ne.s32.totalorder %s94, %s96
      %p103 = scmp.eq.s32.totalorder %s23, 1
      %p104 = por %p102, %p103
      %p105 = scmp.ne.s32.totalorder %s96, %s97
      %p106 = scmp.eq.s32.totalorder %s23, 0
      %p107 = por %p105, %p106
      %p108 = scmp.ne.s32.totalorder %s96, %s97
      %p109 = scmp.eq.s32.totalorder %s24, 1
      %p110 = por %p108, %p109
      %p112 = scmp.ne.s32.totalorder %s97, %s111
      %p113 = scmp.eq.s32.totalorder %s24, 0
      %p114 = por %p112, %p113
      %s116 = sadd.s32 %s115, 1
      %p119 = scmp.eq.s32.totalorder %s18, 1
      %p120 = scmp.ne.s32.totalorder %s115, %s117
      %p121 = scmp.eq.s32.totalorder %s18, 0
      %p122 = por %p120, %p121
      %p123 = scmp.ne.s32.totalorder %s115, %s117
      %p124 = scmp.eq.s32.totalorder %s23, 1
      %p125 = por %p123, %p124
      %p126 = scmp.ne.s32.totalorder %s117, %s118
      %p127 = scmp.eq.s32.totalorder %s23, 0
      %p128 = por %p126, %p127
      %p129 = scmp.ne.s32.totalorder %s117, %s118
      %p130 = scmp.eq.s32.totalorder %s24, 1
      %p131 = por %p129, %p130
      %p133 = scmp.ne.s32.totalorder %s118, %s132
      %p134 = scmp.eq.s32.totalorder %s24, 0
      %p135 = por %p133, %p134
      %s136 = ssub.s32 %s18, %s25
      %p137 = scmp.eq.s32.totalorder %s136, 0
      %s139 = sadd.s32 %s138, 1
      %s140 = scalar_select %p137, %s138, %s139
      %p143 = pneg %p137
      %p144 = scmp.eq.s32.totalorder %s18, 1
      %p145 = por %p143, %p144
      %p146 = scmp.ne.s32.totalorder %s138, %s141
      %p147 = scmp.eq.s32.totalorder %s18, 0
      %p148 = por %p146, %p147
      %p149 = scmp.ne.s32.totalorder %s138, %s141
      %p150 = scmp.eq.s32.totalorder %s23, 1
      %p151 = por %p149, %p150
      %p152 = scmp.ne.s32.totalorder %s141, %s142
      %p153 = scmp.eq.s32.totalorder %s23, 0
      %p154 = por %p152, %p153
      %p155 = scmp.ne.s32.totalorder %s141, %s142
      %p156 = scmp.eq.s32.totalorder %s24, 1
      %p157 = por %p155, %p156
      %p159 = scmp.ne.s32.totalorder %s142, %s158
      %p160 = scmp.eq.s32.totalorder %s24, 0
      %p161 = por %p159, %p160
      %p162 = scmp.le.s32.totalorder 1, %s18
      %p163 = scmp.lt.s32.totalorder %s18, 3
      %p164 = pnand %p162, %p163
      %p165 = pneg %p164
      // Predicated region
      $region9: #{tpu_custom_call.1} parent=5 // pred_check
        _
      $region10: #{tpu_custom_call.1} parent=5 // pred_check_branch
        %167 = sbr.rel (%p164) target = $region12
      $region11: #{tpu_custom_call.1} parent=5 // pred_region
        %s168 = ssub.s32 %s18, 1
        // Predicated region
        $region13: #{tpu_custom_call.1} parent=11 // pred_check
          %p169 = pneg %p65
        $region14: #{tpu_custom_call.1} parent=11 // pred_check_branch
          %171 = sbr.rel (%p169) target = $region16
        $region15: #{tpu_custom_call.1} parent=11 // pred_region
          %s173 = ssub.s32 1024, 1024
          %174 = vsyncadd [#allocation6], %s173
          %s175 = sshll.u32 [#allocation5], 4
          %s176 = int_to_ptr.vmem [resolvable:$true] %s175
          %181 = dma.hbm_to_vmem [thread:$0]  %s1, 1024, %s176, [#allocation6], 64, 64, 4
        $region16: #{tpu_custom_call.1} parent=11 // pred_fallthru
          _
        // Predicated region
        $region17: #{tpu_custom_call.1} parent=11 // pred_check
          %p182 = pneg %p86
        $region18: #{tpu_custom_call.1} parent=11 // pred_check_branch
          %184 = sbr.rel (%p182) target = $region20
        $region19: #{tpu_custom_call.1} parent=11 // pred_region
          _
        $region20: #{tpu_custom_call.1} parent=11 // pred_fallthru
          _
        // Predicated region
        $region21: #{tpu_custom_call.1} parent=11 // pred_check
          %p185 = pneg %p107
        $region22: #{tpu_custom_call.1} parent=11 // pred_check_branch
          %187 = sbr.rel (%p185) target = $region24
        $region23: #{tpu_custom_call.1} parent=11 // pred_region
          %s189 = ssub.s32 1024, 1024
          %190 = vsyncadd [#allocation6], %s189
          %s191 = sshll.u32 [#allocation7], 4
          %s192 = int_to_ptr.vmem [resolvable:$true] %s191
          %197 = dma.hbm_to_vmem [thread:$0]  %s3, 1024, %s192, [#allocation6], 64, 64, 4
        $region24: #{tpu_custom_call.1} parent=11 // pred_fallthru
          _
        // Predicated region
        $region25: #{tpu_custom_call.1} parent=11 // pred_check
          %p198 = pneg %p128
        $region26: #{tpu_custom_call.1} parent=11 // pred_check_branch
          %200 = sbr.rel (%p198) target = $region28
        $region27: #{tpu_custom_call.1} parent=11 // pred_region
          _
        $region28: #{tpu_custom_call.1} parent=11 // pred_fallthru
          _
      $region12: #{tpu_custom_call.1} parent=5 // pred_fallthru
        _
      %p201 = scmp.lt.s32.totalorder %s18, 2
      // Predicated region
      $region29: #{tpu_custom_call.1} parent=5 // pred_check
        %p202 = pneg %p201
      $region30: #{tpu_custom_call.1} parent=5 // pred_check_branch
        %204 = sbr.rel (%p202) target = $region32
      $region31: #{tpu_custom_call.1} parent=5 // pred_region
        // Predicated region
        $region33: #{tpu_custom_call.1} parent=31 // pred_check
          %p205 = pneg %p38
        $region34: #{tpu_custom_call.1} parent=31 // pred_check_branch
          %207 = sbr.rel (%p205) target = $region36
        $region35: #{tpu_custom_call.1} parent=31 // pred_region
          %s208 = sand.u32 %s28, 1
          %s209 = scalar_lea.sflag [#allocation3], %s208
          %s210 = sand.u32 %s28, 1
          %s211 = smul.addr %s210, 16
          %s212 = scalar_lea.vmem [#allocation2], %s211
          %s213 = smul.u32 2, %s18
          %s215 = ssub.s32 256, 256
          %216 = vsyncadd %s209, %s215
          %s217 = smul.addr %s213, 128
          %s218 = scalar_lea.hbm %s0, %s217
          %s219 = sshll.u32 %s212, 4
          %s220 = int_to_ptr.vmem [resolvable:$true] %s219
          %225 = dma.hbm_to_vmem [thread:$0]  %s218, 256, %s220, %s209, 128, 128, 8
        $region36: #{tpu_custom_call.1} parent=31 // pred_fallthru
          _
      $region32: #{tpu_custom_call.1} parent=5 // pred_fallthru
        _
      %p226 = scmp.le.s32.totalorder 1, %s18
      %p227 = scmp.lt.s32.totalorder %s18, 3
      %p228 = pnand %p226, %p227
      %p229 = pneg %p228
      // Predicated region
      $region37: #{tpu_custom_call.1} parent=5 // pred_check
        _
      $region38: #{tpu_custom_call.1} parent=5 // pred_check_branch
        %231 = sbr.rel (%p228) target = $region40
      $region39: #{tpu_custom_call.1} parent=5 // pred_region
        %s232 = ssub.s32 %s18, 1
        %s233 = sand.u32 %s31, 1
        %s234 = scalar_lea.sflag [#allocation3], %s233
        %s235 = sand.u32 %s31, 1
        %s236 = smul.addr %s235, 16
        %s237 = scalar_lea.vmem [#allocation2], %s236
        // Predicated region
        $region41: #{tpu_custom_call.1} parent=39 // pred_check
          %p238 = pneg %p44
        $region42: #{tpu_custom_call.1} parent=39 // pred_check_branch
          %240 = sbr.rel (%p238) target = $region44
        $region43: #{tpu_custom_call.1} parent=39 // pred_region
          %241 = dma.done %s234, 256
        $region44: #{tpu_custom_call.1} parent=39 // pred_fallthru
          _
        // Predicated region
        $region45: #{tpu_custom_call.1} parent=39 // pred_check
          %p242 = pneg %p65
        $region46: #{tpu_custom_call.1} parent=39 // pred_check_branch
          %244 = sbr.rel (%p242) target = $region48
        $region47: #{tpu_custom_call.1} parent=39 // pred_region
          %245 = dma.done [#allocation6], 1024
        $region48: #{tpu_custom_call.1} parent=39 // pred_fallthru
          _
        // Predicated region
        $region49: #{tpu_custom_call.1} parent=39 // pred_check
          %p246 = pneg %p107
        $region50: #{tpu_custom_call.1} parent=39 // pred_check_branch
          %248 = sbr.rel (%p246) target = $region52
        $region51: #{tpu_custom_call.1} parent=39 // pred_region
          %249 = dma.done [#allocation6], 1024
        $region52: #{tpu_custom_call.1} parent=39 // pred_fallthru
          _
        %s250 = sand.u32 %s31, 1
        %s251 = scalar_lea.sflag [#allocation3], %s250
        %s252 = sand.u32 %s31, 1
        %s253 = smul.addr %s252, 16
        %s254 = scalar_lea.vmem [#allocation2], %s253
        %p255 = pneg %p44
        %p256 = pneg %p41
        %p257 = pneg %p65
        %p258 = pneg %p62
        %p259 = pneg %p86
        %p260 = pneg %p83
        %p261 = pneg %p107
        %p262 = pneg %p104
        %p263 = pneg %p128
        %p264 = pneg %p125
        %p265 = pneg %p154
        %p266 = pneg %p151
        %s267 = sand.u32 %s141, 1
        %s268 = scalar_lea.sflag [#allocation4], %s267
        %s269 = sand.u32 %s141, 1
        %s270 = smul.addr %s269, 16
        %s271 = scalar_lea.vmem [#allocation8], %s270
        %s272 = smul.u32 2, %s23
        %s273 = smul.u32 2, %s23
        %v275 = vld [vmem:[%s237] sm:$0xff]
        %v276 = vld [vmem:[%s237 + $0x8] sm:$0xff]
        %v277 = vpack.c.bf16 %v276, %v275
        %v278 = vld [vmem:[#allocation5] sm:$0xf]
        %v279 = vld [vmem:[#allocation5 + $0x4] sm:$0xf]
        %v280 = vld [vmem:[#allocation5 + $0x8] sm:$0xf]
        %v281 = vld [vmem:[#allocation5 + $0xc] sm:$0xf]
        %v282 = vld [vmem:[#allocation5 + $0x10] sm:$0xf]
        %v283 = vld [vmem:[#allocation5 + $0x14] sm:$0xf]
        %v284 = vld [vmem:[#allocation5 + $0x18] sm:$0xf]
        %v285 = vld [vmem:[#allocation5 + $0x1c] sm:$0xf]
        %v286 = vld [vmem:[#allocation5 + $0x20] sm:$0xf]
        %v287 = vld [vmem:[#allocation5 + $0x24] sm:$0xf]
        %v288 = vld [vmem:[#allocation5 + $0x28] sm:$0xf]
        %v289 = vld [vmem:[#allocation5 + $0x2c] sm:$0xf]
        %v290 = vld [vmem:[#allocation5 + $0x30] sm:$0xf]
        %v291 = vld [vmem:[#allocation5 + $0x34] sm:$0xf]
        %v292 = vld [vmem:[#allocation5 + $0x38] sm:$0xf]
        %v293 = vld [vmem:[#allocation5 + $0x3c] sm:$0xf]
        %v294 = vld [vmem:[%s2] sm:$0x1]
        %v296 = vlaneseq
        %v297 = vshrl.u32 %v296, 7
        %v298 = vsub.s32 0, %v297
        %v299 = vrot.slane %v294, %v298
        %v317 = vunpack.c.l.b16 %v278
        %v318 = vunpack.c.l.b16 %v279
        %v319 = vunpack.c.l.b16 %v280
        %v320 = vunpack.c.l.b16 %v281
        %v321 = vunpack.c.l.b16 %v282
        %v322 = vunpack.c.l.b16 %v283
        %v323 = vunpack.c.l.b16 %v284
        %v324 = vunpack.c.l.b16 %v285
        %v325 = vunpack.c.l.b16 %v286
        %v326 = vunpack.c.l.b16 %v287
        %v327 = vunpack.c.l.b16 %v288
        %v328 = vunpack.c.l.b16 %v289
        %v329 = vunpack.c.l.b16 %v290
        %v330 = vunpack.c.l.b16 %v291
        %v331 = vunpack.c.l.b16 %v292
        %v332 = vunpack.c.l.b16 %v293
        %v333 = vpack.c.b16 %v318, %v317
        %v334 = vpack.c.b16 %v320, %v319
        %v335 = vpack.c.b16 %v322, %v321
        %v336 = vpack.c.b16 %v324, %v323
        %v337 = vpack.c.b16 %v326, %v325
        %v338 = vpack.c.b16 %v328, %v327
        %v339 = vpack.c.b16 %v330, %v329
        %v340 = vpack.c.b16 %v332, %v331
        %349 = vmatprep.subr.bf16.mxu0 0
        %350 = vmatpush1.bf16.msra.mxu0 %v333
        %351 = vmatprep.subr.bf16.mxu0 0
        %352 = vmatpush1.bf16.msra.mxu0 %v334
        %353 = vmatprep.subr.bf16.mxu0 0
        %354 = vmatpush1.bf16.msra.mxu0 %v335
        %355 = vmatprep.subr.bf16.mxu0 0
        %356 = vmatpush1.bf16.msra.mxu0 %v336
        %357 = vmatprep.subr.bf16.mxu0 0
        %358 = vmatpush1.bf16.msra.mxu0 %v337
        %359 = vmatprep.subr.bf16.mxu0 0
        %360 = vmatpush1.bf16.msra.mxu0 %v338
        %361 = vmatprep.subr.bf16.mxu0 0
        %362 = vmatpush1.bf16.msra.mxu0 %v339
        %363 = vmatprep.subr.bf16.mxu0 0
        %364 = vmatpush1.bf16.msra.mxu0 %v340
        %365 = vmatprep.subr.bf16.mxu0 0
        %366 = vmatpush1.bf16.msra.mxu0 0
        %367 = vmatprep.subr.bf16.mxu0 0
        %368 = vmatpush1.bf16.msra.mxu0 0
        %369 = vmatprep.subr.bf16.mxu0 0
        %370 = vmatpush1.bf16.msra.mxu0 0
        %371 = vmatprep.subr.bf16.mxu0 0
        %372 = vmatpush1.bf16.msra.mxu0 0
        %373 = vmatprep.subr.bf16.mxu0 0
        %374 = vmatpush1.bf16.msra.mxu0 0
        %375 = vmatprep.subr.bf16.mxu0 0
        %376 = vmatpush1.bf16.msra.mxu0 0
        %377 = vmatprep.subr.bf16.mxu0 0
        %378 = vmatpush1.bf16.msra.mxu0 0
        %379 = vmatprep.subr.bf16.mxu0 0
        %380 = vmatpush1.bf16.msra.mxu0 0
        %381 = vmatprep.mubr.bf16.mxu0 0
        %382 = vmatmul.mubr.bf16.gmra.mrb[0].mxu0 %v277
        %v383 = vpop.f32.mrb[0].mxu0
        %v384 = vadd.f32 %v299, %v383
        %v385 = vpop.f32.mrb[0].mxu0
        %v386 = vpop.f32.mrb[0].mxu0
        %v387 = vadd.f32 %v299, %v386
        %v388 = vpop.f32.mrb[0].mxu0
        %389 = vdwg.mxu0
        %v390 = vmul.f32 %v384, %v384
        %v391 = vmul.f32 %v387, %v387
        %v392 = vrot.slane %v384, 4
        %v393 = vadd.f32 %v384, %v392
        %v394 = vrot.slane %v393, 2
        %v395 = vadd.f32 %v393, %v394
        %v396 = vrot.slane %v395, 1
        %v397 = vadd.f32 %v395, %v396
        %v398 = vrot.slane %v387, 4
        %v399 = vadd.f32 %v387, %v398
        %v400 = vrot.slane %v399, 2
        %v401 = vadd.f32 %v399, %v400
        %v402 = vrot.slane %v401, 1
        %v403 = vadd.f32 %v401, %v402
        %v404 = vmul.f32 %v397, 0.125
        %v405 = vmul.f32 %v403, 0.125
        %v406 = vrot.slane %v390, 4
        %v407 = vadd.f32 %v390, %v406
        %v408 = vrot.slane %v407, 2
        %v409 = vadd.f32 %v407, %v408
        %v410 = vrot.slane %v409, 1
        %v411 = vadd.f32 %v409, %v410
        %v412 = vrot.slane %v391, 4
        %v413 = vadd.f32 %v391, %v412
        %v414 = vrot.slane %v413, 2
        %v415 = vadd.f32 %v413, %v414
        %v416 = vrot.slane %v415, 1
        %v417 = vadd.f32 %v415, %v416
        %v418 = vmul.f32 %v411, 0.125
        %v419 = vmul.f32 %v417, 0.125
        %v420 = vmul.f32 %v404, %v404
        %v421 = vmul.f32 %v405, %v405
        %v422 = vsub.f32 %v418, %v420
        %v423 = vsub.f32 %v419, %v421
        %v424 = vmax.f32 %v422, 0.0
        %v425 = vmax.f32 %v423, 0.0
        %v426 = vlaneseq
        %v427 = vshrl.u32 %v426, 7
        %v428 = vadd.s32 %v427, 8
        %v429 = vadd.s32 %v427, 16
        %v430 = vadd.s32 %v427, 24
        %v431 = vadd.s32 %v427, 32
        %v432 = vadd.s32 %v427, 40
        %v433 = vadd.s32 %v427, 48
        %v434 = vadd.s32 %v427, 56
        %v435 = vadd.s32 %v427, 64
        %v436 = vadd.s32 %v427, 72
        %v437 = vadd.s32 %v427, 80
        %v438 = vadd.s32 %v427, 88
        %v439 = vadd.s32 %v427, 96
        %v440 = vadd.s32 %v427, 104
        %v441 = vadd.s32 %v427, 112
        %v442 = vadd.s32 %v427, 120
        %vm443 = vcmp.ge.s32.totalorder %v427, 64
        %vm444 = vcmp.ge.s32.totalorder %v428, 64
        %vm445 = vcmp.ge.s32.totalorder %v429, 64
        %vm446 = vcmp.ge.s32.totalorder %v430, 64
        %vm447 = vcmp.ge.s32.totalorder %v431, 64
        %vm448 = vcmp.ge.s32.totalorder %v432, 64
        %vm449 = vcmp.ge.s32.totalorder %v433, 64
        %vm450 = vcmp.ge.s32.totalorder %v434, 64
        %vm451 = vcmp.ge.s32.totalorder %v435, 64
        %vm452 = vcmp.ge.s32.totalorder %v436, 64
        %vm453 = vcmp.ge.s32.totalorder %v437, 64
        %vm454 = vcmp.ge.s32.totalorder %v438, 64
        %vm455 = vcmp.ge.s32.totalorder %v439, 64
        %vm456 = vcmp.ge.s32.totalorder %v440, 64
        %vm457 = vcmp.ge.s32.totalorder %v441, 64
        %vm458 = vcmp.ge.s32.totalorder %v442, 64
        %v459 = vsel %vm443, 1, 0
        %v460 = vsel %vm444, 1, 0
        %v461 = vsel %vm445, 1, 0
        %v462 = vsel %vm446, 1, 0
        %v463 = vsel %vm447, 1, 0
        %v464 = vsel %vm448, 1, 0
        %v465 = vsel %vm449, 1, 0
        %v466 = vsel %vm450, 1, 0
        %v467 = vsel %vm451, 1, 0
        %v468 = vsel %vm452, 1, 0
        %v469 = vsel %vm453, 1, 0
        %v470 = vsel %vm454, 1, 0
        %v471 = vsel %vm455, 1, 0
        %v472 = vsel %vm456, 1, 0
        %v473 = vsel %vm457, 1, 0
        %v474 = vsel %vm458, 1, 0
        %v475 = vcvt.s32.f32 %v459
        %v476 = vcvt.s32.f32 %v460
        %v477 = vcvt.s32.f32 %v461
        %v478 = vcvt.s32.f32 %v462
        %v479 = vcvt.s32.f32 %v463
        %v480 = vcvt.s32.f32 %v464
        %v481 = vcvt.s32.f32 %v465
        %v482 = vcvt.s32.f32 %v466
        %v483 = vcvt.s32.f32 %v467
        %v484 = vcvt.s32.f32 %v468
        %v485 = vcvt.s32.f32 %v469
        %v486 = vcvt.s32.f32 %v470
        %v487 = vcvt.s32.f32 %v471
        %v488 = vcvt.s32.f32 %v472
        %v489 = vcvt.s32.f32 %v473
        %v490 = vcvt.s32.f32 %v474
        %v491 = vmul.f32 %v475, 0.015625
        %v492 = vmul.f32 %v476, 0.015625
        %v493 = vmul.f32 %v477, 0.015625
        %v494 = vmul.f32 %v478, 0.015625
        %v495 = vmul.f32 %v479, 0.015625
        %v496 = vmul.f32 %v480, 0.015625
        %v497 = vmul.f32 %v481, 0.015625
        %v498 = vmul.f32 %v482, 0.015625
        %v499 = vmul.f32 %v483, 0.015625
        %v500 = vmul.f32 %v484, 0.015625
        %v501 = vmul.f32 %v485, 0.015625
        %v502 = vmul.f32 %v486, 0.015625
        %v503 = vmul.f32 %v487, 0.015625
        %v504 = vmul.f32 %v488, 0.015625
        %v505 = vmul.f32 %v489, 0.015625
        %v506 = vmul.f32 %v490, 0.015625
        %507 = vmatprep.subr.mxu0 0.0
        %508 = vmatpush1.msra.mxu0 %v491
        %509 = vmatprep.subr.mxu0 0.0
        %510 = vmatpush1.msra.mxu0 %v492
        %511 = vmatprep.subr.mxu0 0.0
        %512 = vmatpush1.msra.mxu0 %v493
        %513 = vmatprep.subr.mxu0 0.0
        %514 = vmatpush1.msra.mxu0 %v494
        %515 = vmatprep.subr.mxu0 0.0
        %516 = vmatpush1.msra.mxu0 %v495
        %517 = vmatprep.subr.mxu0 0.0
        %518 = vmatpush1.msra.mxu0 %v496
        %519 = vmatprep.subr.mxu0 0.0
        %520 = vmatpush1.msra.mxu0 %v497
        %521 = vmatprep.subr.mxu0 0.0
        %522 = vmatpush1.msra.mxu0 %v498
        %523 = vmatprep.subr.mxu0 0.0
        %524 = vmatpush1.msra.mxu0 %v499
        %525 = vmatprep.subr.mxu0 0.0
        %526 = vmatpush1.msra.mxu0 %v500
        %527 = vmatprep.subr.mxu0 0.0
        %528 = vmatpush1.msra.mxu0 %v501
        %529 = vmatprep.subr.mxu0 0.0
        %530 = vmatpush1.msra.mxu0 %v502
        %531 = vmatprep.subr.mxu0 0.0
        %532 = vmatpush1.msra.mxu0 %v503
        %533 = vmatprep.subr.mxu0 0.0
        %534 = vmatpush1.msra.mxu0 %v504
        %535 = vmatprep.subr.mxu0 0.0
        %536 = vmatpush1.msra.mxu0 %v505
        %537 = vmatprep.subr.mxu0 0.0
        %538 = vmatpush1.msra.mxu0 %v506
        %539 = vmatprep.subr.mxu0 0.0
        %540 = vmatpush1.msra.mxu0 0.0
        %541 = vmatprep.subr.mxu0 0.0
        %542 = vmatpush1.msra.mxu0 0.0
        %543 = vmatprep.subr.mxu0 0.0
        %544 = vmatpush1.msra.mxu0 0.0
        %545 = vmatprep.subr.mxu0 0.0
        %546 = vmatpush1.msra.mxu0 0.0
        %547 = vmatprep.subr.mxu0 0.0
        %548 = vmatpush1.msra.mxu0 0.0
        %549 = vmatprep.subr.mxu0 0.0
        %550 = vmatpush1.msra.mxu0 0.0
        %551 = vmatprep.subr.mxu0 0.0
        %552 = vmatpush1.msra.mxu0 0.0
        %553 = vmatprep.subr.mxu0 0.0
        %554 = vmatpush1.msra.mxu0 0.0
        %555 = vmatprep.subr.mxu0 0.0
        %556 = vmatpush1.msra.mxu0 0.0
        %557 = vmatprep.subr.mxu0 0.0
        %558 = vmatpush1.msra.mxu0 0.0
        %559 = vmatprep.subr.mxu0 0.0
        %560 = vmatpush1.msra.mxu0 0.0
        %561 = vmatprep.subr.mxu0 0.0
        %562 = vmatpush1.msra.mxu0 0.0
        %563 = vmatprep.subr.mxu0 0.0
        %564 = vmatpush1.msra.mxu0 0.0
        %565 = vmatprep.subr.mxu0 0.0
        %566 = vmatpush1.msra.mxu0 0.0
        %567 = vmatprep.subr.mxu0 0.0
        %568 = vmatpush1.msra.mxu0 0.0
        %569 = vmatprep.subr.mxu0 0.0
        %570 = vmatpush1.msra.mxu0 0.0
        %571 = vmatprep.mubr.f32.mxu0 0.0
        %572 = vmatmul.mubr.f32.gmra.mrb[0].mxu0 %v384
        %v573 = vpop.f32.mrb[0].mxu0
        %v574 = vadd.f32 0.0, %v573
        %v575 = vpop.f32.mrb[0].mxu0
        %576 = vmatprep.mubr.f32.mxu0 0.0
        %577 = vmatmul.mubr.f32.gmra.mrb[0].mxu0 %v387
        %v578 = vpop.f32.mrb[0].mxu0
        %v579 = vadd.f32 0.0, %v578
        %v580 = vpop.f32.mrb[0].mxu0
        %581 = vdwg.mxu0
        %582 = vmatprep.subr.mxu0 0.0
        %583 = vmatpush1.msra.mxu0 %v491
        %584 = vmatprep.subr.mxu0 0.0
        %585 = vmatpush1.msra.mxu0 %v492
        %586 = vmatprep.subr.mxu0 0.0
        %587 = vmatpush1.msra.mxu0 %v493
        %588 = vmatprep.subr.mxu0 0.0
        %589 = vmatpush1.msra.mxu0 %v494
        %590 = vmatprep.subr.mxu0 0.0
        %591 = vmatpush1.msra.mxu0 %v495
        %592 = vmatprep.subr.mxu0 0.0
        %593 = vmatpush1.msra.mxu0 %v496
        %594 = vmatprep.subr.mxu0 0.0
        %595 = vmatpush1.msra.mxu0 %v497
        %596 = vmatprep.subr.mxu0 0.0
        %597 = vmatpush1.msra.mxu0 %v498
        %598 = vmatprep.subr.mxu0 0.0
        %599 = vmatpush1.msra.mxu0 %v499
        %600 = vmatprep.subr.mxu0 0.0
        %601 = vmatpush1.msra.mxu0 %v500
        %602 = vmatprep.subr.mxu0 0.0
        %603 = vmatpush1.msra.mxu0 %v501
        %604 = vmatprep.subr.mxu0 0.0
        %605 = vmatpush1.msra.mxu0 %v502
        %606 = vmatprep.subr.mxu0 0.0
        %607 = vmatpush1.msra.mxu0 %v503
        %608 = vmatprep.subr.mxu0 0.0
        %609 = vmatpush1.msra.mxu0 %v504
        %610 = vmatprep.subr.mxu0 0.0
        %611 = vmatpush1.msra.mxu0 %v505
        %612 = vmatprep.subr.mxu0 0.0
        %613 = vmatpush1.msra.mxu0 %v506
        %614 = vmatprep.subr.mxu0 0.0
        %615 = vmatpush1.msra.mxu0 0.0
        %616 = vmatprep.subr.mxu0 0.0
        %617 = vmatpush1.msra.mxu0 0.0
        %618 = vmatprep.subr.mxu0 0.0
        %619 = vmatpush1.msra.mxu0 0.0
        %620 = vmatprep.subr.mxu0 0.0
        %621 = vmatpush1.msra.mxu0 0.0
        %622 = vmatprep.subr.mxu0 0.0
        %623 = vmatpush1.msra.mxu0 0.0
        %624 = vmatprep.subr.mxu0 0.0
        %625 = vmatpush1.msra.mxu0 0.0
        %626 = vmatprep.subr.mxu0 0.0
        %627 = vmatpush1.msra.mxu0 0.0
        %628 = vmatprep.subr.mxu0 0.0
        %629 = vmatpush1.msra.mxu0 0.0
        %630 = vmatprep.subr.mxu0 0.0
        %631 = vmatpush1.msra.mxu0 0.0
        %632 = vmatprep.subr.mxu0 0.0
        %633 = vmatpush1.msra.mxu0 0.0
        %634 = vmatprep.subr.mxu0 0.0
        %635 = vmatpush1.msra.mxu0 0.0
        %636 = vmatprep.subr.mxu0 0.0
        %637 = vmatpush1.msra.mxu0 0.0
        %638 = vmatprep.subr.mxu0 0.0
        %639 = vmatpush1.msra.mxu0 0.0
        %640 = vmatprep.subr.mxu0 0.0
        %641 = vmatpush1.msra.mxu0 0.0
        %642 = vmatprep.subr.mxu0 0.0
        %643 = vmatpush1.msra.mxu0 0.0
        %644 = vmatprep.subr.mxu0 0.0
        %645 = vmatpush1.msra.mxu0 0.0
        %646 = vmatprep.mubr.f32.mxu0 0.0
        %647 = vmatmul.mubr.f32.gmra.mrb[0].mxu0 %v390
        %v648 = vpop.f32.mrb[0].mxu0
        %v649 = vadd.f32 0.0, %v648
        %v650 = vpop.f32.mrb[0].mxu0
        %651 = vmatprep.mubr.f32.mxu0 0.0
        %652 = vmatmul.mubr.f32.gmra.mrb[0].mxu0 %v391
        %v653 = vpop.f32.mrb[0].mxu0
        %v654 = vadd.f32 0.0, %v653
        %v655 = vpop.f32.mrb[0].mxu0
        %656 = vdwg.mxu0
        %v657 = vmul.f32 %v574, %v574
        %v658 = vmul.f32 %v579, %v579
        %v659 = vsub.f32 %v649, %v657
        %v660 = vsub.f32 %v654, %v658
        %v661 = vmax.f32 %v659, 0.0
        %v662 = vmax.f32 %v660, 0.0
        %v663 = vlaneseq
        %v664 = vand.u32 %v663, 127
        %vm665 = vcmp.ge.s32.totalorder %v664, 64
        %v666 = vsel %vm665, 1, 0
        %vm667 = vcmp.eq.s32.totalorder %v666, 1
        %669 = vset.pattern.permute.xlu0 0
        %670 = vperm.xlu0 %669, %v574
        %v671 = vpop.permute.xlu0 %670
        %674 = vset.pattern.permute.xlu0 0
        %675 = vperm.xlu0 %674, %v579
        %v676 = vpop.permute.xlu0 %675
        %v678 = vsel %vm667, %v671, %v404
        %v679 = vsel %vm667, %v676, %v405
        %v680 = vadd.f32 %v661, 1e-05
        %v681 = vadd.f32 %v662, 1e-05
        %v682 = vrsqrt.pop %v680
        %v683 = vrsqrt.pop %v681
        %v684 = vadd.f32 %v424, 1e-05
        %v685 = vadd.f32 %v425, 1e-05
        %v686 = vrsqrt.pop %v684
        %v687 = vrsqrt.pop %v685
        %689 = vset.pattern.permute.xlu0 0
        %690 = vperm.xlu0 %689, %v682
        %v691 = vpop.permute.xlu0 %690
        %694 = vset.pattern.permute.xlu0 0
        %695 = vperm.xlu0 %694, %v683
        %v696 = vpop.permute.xlu0 %695
        %v698 = vsel %vm667, %v691, %v686
        %v699 = vsel %vm667, %v696, %v687
        %v700 = vsub.f32 %v384, %v678
        %v701 = vsub.f32 %v387, %v679
        %v702 = vmul.f32 %v700, %v698
        %v703 = vmul.f32 %v701, %v699
        %v704 = vpack.c.bf16 %v703, %v702
        %v705 = vld [vmem:[#allocation7] sm:$0xf]
        %v706 = vld [vmem:[#allocation7 + $0x4] sm:$0xf]
        %v707 = vld [vmem:[#allocation7 + $0x8] sm:$0xf]
        %v708 = vld [vmem:[#allocation7 + $0xc] sm:$0xf]
        %v709 = vld [vmem:[#allocation7 + $0x10] sm:$0xf]
        %v710 = vld [vmem:[#allocation7 + $0x14] sm:$0xf]
        %v711 = vld [vmem:[#allocation7 + $0x18] sm:$0xf]
        %v712 = vld [vmem:[#allocation7 + $0x1c] sm:$0xf]
        %v713 = vld [vmem:[#allocation7 + $0x20] sm:$0xf]
        %v714 = vld [vmem:[#allocation7 + $0x24] sm:$0xf]
        %v715 = vld [vmem:[#allocation7 + $0x28] sm:$0xf]
        %v716 = vld [vmem:[#allocation7 + $0x2c] sm:$0xf]
        %v717 = vld [vmem:[#allocation7 + $0x30] sm:$0xf]
        %v718 = vld [vmem:[#allocation7 + $0x34] sm:$0xf]
        %v719 = vld [vmem:[#allocation7 + $0x38] sm:$0xf]
        %v720 = vld [vmem:[#allocation7 + $0x3c] sm:$0xf]
        %v721 = vld [vmem:[%s4] sm:$0x1]
        %v723 = vlaneseq
        %v724 = vshrl.u32 %v723, 7
        %v725 = vsub.s32 0, %v724
        %v726 = vrot.slane %v721, %v725
        %v744 = vunpack.c.l.b16 %v705
        %v745 = vunpack.c.l.b16 %v706
        %v746 = vunpack.c.l.b16 %v707
        %v747 = vunpack.c.l.b16 %v708
        %v748 = vunpack.c.l.b16 %v709
        %v749 = vunpack.c.l.b16 %v710
        %v750 = vunpack.c.l.b16 %v711
        %v751 = vunpack.c.l.b16 %v712
        %v752 = vunpack.c.l.b16 %v713
        %v753 = vunpack.c.l.b16 %v714
        %v754 = vunpack.c.l.b16 %v715
        %v755 = vunpack.c.l.b16 %v716
        %v756 = vunpack.c.l.b16 %v717
        %v757 = vunpack.c.l.b16 %v718
        %v758 = vunpack.c.l.b16 %v719
        %v759 = vunpack.c.l.b16 %v720
        %v760 = vpack.c.b16 %v745, %v744
        %v761 = vpack.c.b16 %v747, %v746
        %v762 = vpack.c.b16 %v749, %v748
        %v763 = vpack.c.b16 %v751, %v750
        %v764 = vpack.c.b16 %v753, %v752
        %v765 = vpack.c.b16 %v755, %v754
        %v766 = vpack.c.b16 %v757, %v756
        %v767 = vpack.c.b16 %v759, %v758
        %776 = vmatprep.subr.bf16.mxu0 0
        %777 = vmatpush1.bf16.msra.mxu0 %v760
        %778 = vmatprep.subr.bf16.mxu0 0
        %779 = vmatpush1.bf16.msra.mxu0 %v761
        %780 = vmatprep.subr.bf16.mxu0 0
        %781 = vmatpush1.bf16.msra.mxu0 %v762
        %782 = vmatprep.subr.bf16.mxu0 0
        %783 = vmatpush1.bf16.msra.mxu0 %v763
        %784 = vmatprep.subr.bf16.mxu0 0
        %785 = vmatpush1.bf16.msra.mxu0 %v764
        %786 = vmatprep.subr.bf16.mxu0 0
        %787 = vmatpush1.bf16.msra.mxu0 %v765
        %788 = vmatprep.subr.bf16.mxu0 0
        %789 = vmatpush1.bf16.msra.mxu0 %v766
        %790 = vmatprep.subr.bf16.mxu0 0
        %791 = vmatpush1.bf16.msra.mxu0 %v767
        %792 = vmatprep.subr.bf16.mxu0 0
        %793 = vmatpush1.bf16.msra.mxu0 0
        %794 = vmatprep.subr.bf16.mxu0 0
        %795 = vmatpush1.bf16.msra.mxu0 0
        %796 = vmatprep.subr.bf16.mxu0 0
        %797 = vmatpush1.bf16.msra.mxu0 0
        %798 = vmatprep.subr.bf16.mxu0 0
        %799 = vmatpush1.bf16.msra.mxu0 0
        %800 = vmatprep.subr.bf16.mxu0 0
        %801 = vmatpush1.bf16.msra.mxu0 0
        %802 = vmatprep.subr.bf16.mxu0 0
        %803 = vmatpush1.bf16.msra.mxu0 0
        %804 = vmatprep.subr.bf16.mxu0 0
        %805 = vmatpush1.bf16.msra.mxu0 0
        %806 = vmatprep.subr.bf16.mxu0 0
        %807 = vmatpush1.bf16.msra.mxu0 0
        %808 = vmatprep.mubr.bf16.mxu0 0
        %809 = vmatmul.mubr.bf16.gmra.mrb[0].mxu0 %v704
        %v810 = vpop.f32.mrb[0].mxu0
        %v811 = vadd.f32 %v726, %v810
        %v812 = vpop.f32.mrb[0].mxu0
        %v813 = vpop.f32.mrb[0].mxu0
        %v814 = vadd.f32 %v726, %v813
        %v815 = vpop.f32.mrb[0].mxu0
        %816 = vdwg.mxu0
        %817 = vst [vmem:[%s271] sm:$0xff] %v811
        %818 = vst [vmem:[%s271 + $0x8] sm:$0xff] %v814
        %s819 = sand.u32 %s141, 1
        %s820 = scalar_lea.sflag [#allocation4], %s819
        %s821 = sand.u32 %s141, 1
        %s822 = smul.addr %s821, 16
        %s823 = scalar_lea.vmem [#allocation8], %s822
        // Predicated region
        $region53: #{tpu_custom_call.1} parent=39 // pred_check
          %p824 = pneg %p151
        $region54: #{tpu_custom_call.1} parent=39 // pred_check_branch
          %826 = sbr.rel (%p824) target = $region56
        $region55: #{tpu_custom_call.1} parent=39 // pred_region
          %s827 = smul.u32 2, %s23
          %s829 = ssub.s32 256, 256
          %830 = vsyncadd %s820, %s829
          %s831 = smul.addr %s827, 128
          %s832 = scalar_lea.hbm %s5, %s831
          %s833 = sshll.u32 %s823, 4
          %s834 = int_to_ptr.vmem [resolvable:$true] %s833
          %839 = dma.vmem_to_hbm [thread:$0]  %s834, 256, %s832, %s820, 128, 128, 8
        $region56: #{tpu_custom_call.1} parent=39 // pred_fallthru
          _
      $region40: #{tpu_custom_call.1} parent=5 // pred_fallthru
        _
      %p840 = scmp.le.s32.totalorder 2, %s18
      // Predicated region
      $region57: #{tpu_custom_call.1} parent=5 // pred_check
        %p841 = pneg %p840
      $region58: #{tpu_custom_call.1} parent=5 // pred_check_branch
        %843 = sbr.rel (%p841) target = $region60
      $region59: #{tpu_custom_call.1} parent=5 // pred_region
        %s844 = ssub.s32 %s18, 2
        // Predicated region
        $region61: #{tpu_custom_call.1} parent=59 // pred_check
          %p845 = pneg %p157
        $region62: #{tpu_custom_call.1} parent=59 // pred_check_branch
          %847 = sbr.rel (%p845) target = $region64
        $region63: #{tpu_custom_call.1} parent=59 // pred_region
          %s848 = sand.u32 %s142, 1
          %s849 = scalar_lea.sflag [#allocation4], %s848
          %s850 = sand.u32 %s142, 1
          %s851 = smul.addr %s850, 16
          %s852 = scalar_lea.vmem [#allocation8], %s851
          %853 = dma.done %s849, 256
        $region64: #{tpu_custom_call.1} parent=59 // pred_fallthru
          _
      $region60: #{tpu_custom_call.1} parent=5 // pred_fallthru
        _
    $region6: #{tpu_custom_call.1} parent=1 // loop_footer
      %s22 = sadd.s32 1, %s18
    $region7: #{tpu_custom_call.1} parent=1 // loop_footer_branch
      %17 = sbr.rel target = $region3
    $region8: #{tpu_custom_call.1} parent=1 // loop_exit
      _
    %854 = vsyncpa [#allocation3], 1
    %s855 = scalar_lea.sflag [#allocation3], 1
    %856 = vsyncpa %s855, 1
    %857 = vsyncpa [#allocation6], 1
    %858 = vsyncpa [#allocation4], 1
    %s859 = scalar_lea.sflag [#allocation4], 1
    %860 = vsyncpa %s859, 1

</llo_original>
